<compile_context>
chip_gen: v6e
topology: v6e:2x2x1
jax: 0.10.0
libtpu: 0.0.40
codegen_flags: <defaults>
</compile_context>

<pallas_src>
import functools

import jax
import jax.numpy as jnp
from jax import lax
from jax.experimental import pallas as pl
from jax.experimental.pallas import tpu as pltpu


# ---------------------------------------------------------------------------
# Kernel
# ---------------------------------------------------------------------------

def _ord_moco_hier_kernel(logits_ref, targets_ref, out_ref,
                          m_ref, l_ref, s1_ref, c1_ref, s2_ref, c2_ref,
                          tfirst_ref, *, lambd, q_tile, q_actual):
    """Online (flash-style) accumulation over the queue axis.

    Scratch (all (n_tile, 1) f32, persistent across the queue grid axis):
      m_ref, l_ref        : running max / running sum(exp(x - m))  -> logsumexp
      s1_ref, c1_ref      : sum(x * flag1), count(flag1)
      s2_ref, c2_ref      : sum(x * flag2), count(flag2)
      tfirst_ref          : targets[:, 0] captured at the first queue block
    """
    k = pl.program_id(1)

    @pl.when(k == 0)
    def _init():
        m_ref[...] = jnp.full_like(m_ref, -jnp.inf)
        l_ref[...] = jnp.zeros_like(l_ref)
        s1_ref[...] = jnp.zeros_like(s1_ref)
        c1_ref[...] = jnp.zeros_like(c1_ref)
        s2_ref[...] = jnp.zeros_like(s2_ref)
        c2_ref[...] = jnp.zeros_like(c2_ref)
        tfirst_ref[...] = targets_ref[:, 0:1].astype(jnp.float32)

    x = logits_ref[...].astype(jnp.float32)    # (n_tile, q_tile)
    t = targets_ref[...].astype(jnp.float32)   # (n_tile, q_tile)
    n_t, q_t = x.shape

    # Mask columns that fall into the (possibly) padded queue tail.
    col = k * q_tile + lax.broadcasted_iota(jnp.int32, (n_t, q_t), 1)
    valid = col < q_actual

    neg_inf = jnp.float32(-jnp.inf)
    x_m = jnp.where(valid, x, neg_inf)

    # --- online logsumexp ---------------------------------------------------
    m_old = m_ref[...]
    m_new = jnp.maximum(m_old, jnp.max(x_m, axis=1, keepdims=True))
    l_ref[...] = (l_ref[...] * jnp.exp(m_old - m_new)
                  + jnp.sum(jnp.exp(x_m - m_new), axis=1, keepdims=True))
    m_ref[...] = m_new

    # --- hierarchy flags ------------------------------------------------------
    tfirst = tfirst_ref[...]                                  # (n_tile, 1)
    flag1 = jnp.logical_and(t == tfirst, valid)
    le2 = (t <= 2.0).astype(jnp.float32)
    le2_first = (tfirst <= 2.0).astype(jnp.float32)
    flag2 = jnp.logical_and(le2 == le2_first, valid)

    zero = jnp.float32(0.0)
    s1_ref[...] += jnp.sum(jnp.where(flag1, x, zero), axis=1, keepdims=True)
    c1_ref[...] += jnp.sum(flag1.astype(jnp.float32), axis=1, keepdims=True)
    s2_ref[...] += jnp.sum(jnp.where(flag2, x, zero), axis=1, keepdims=True)
    c2_ref[...] += jnp.sum(flag2.astype(jnp.float32), axis=1, keepdims=True)

    # --- finalize per-row loss on the last queue block ------------------------
    @pl.when(k == pl.num_programs(1) - 1)
    def _finish():
        lse = m_ref[...] + jnp.log(l_ref[...])                # (n_tile, 1)
        # sum_j (lse - x_ij) * flag_ij / sum_j flag_ij == lse - sum(x*flag)/count
        term1 = lse - s1_ref[...] / c1_ref[...]
        term2 = lse - s2_ref[...] / c2_ref[...]
        out_ref[...] = (lambd * term1 + (1.0 - lambd) * term2).astype(out_ref.dtype)


# ---------------------------------------------------------------------------
# Wrapper
# ---------------------------------------------------------------------------

def _round_up(x, m):
    return (x + m - 1) // m * m


def _pick_tile(total, max_tile, align):
    """Choose a tile <= ~max_tile (aligned) that minimizes padding."""
    nb = -(-total // max_tile)                 # number of blocks
    tile = _round_up(-(-total // nb), align)   # balanced, aligned tile
    return tile, nb, nb * tile


@functools.partial(jax.jit, static_argnames=("lambd", "q_tile", "n_tile"))
def ord_label_moco_hierarchy_loss(logits, targets, lambd=0.5,
                                  q_tile=2048, n_tile=256):
    N, Q = logits.shape

    n_t, n_blocks, Np = _pick_tile(N, n_tile, 8)
    q_t, q_blocks, Qp = _pick_tile(Q, q_tile, 128)

    # Pad (rarely needed for production shapes); queue padding is masked
    # in-kernel, padded rows are sliced off before the mean.
    if (Np, Qp) != (N, Q):
        logits = jnp.pad(logits, ((0, Np - N), (0, Qp - Q)))
        targets = jnp.pad(targets, ((0, Np - N), (0, Qp - Q)))

    kernel = functools.partial(_ord_moco_hier_kernel,
                               lambd=float(lambd), q_tile=q_t, q_actual=Q)

    per_row = pl.pallas_call(
        kernel,
        out_shape=jax.ShapeDtypeStruct((Np, 1), jnp.float32),
        grid_spec=pltpu.PrefetchScalarGridSpec(
            num_scalar_prefetch=0,
            grid=(n_blocks, q_blocks),
            in_specs=[
                pl.BlockSpec((n_t, q_t), lambda i, k: (i, k)),
                pl.BlockSpec((n_t, q_t), lambda i, k: (i, k)),
            ],
            out_specs=pl.BlockSpec((n_t, 1), lambda i, k: (i, 0)),
            scratch_shapes=[pltpu.VMEM((n_t, 1), jnp.float32)] * 7,
        ),
        compiler_params=pltpu.CompilerParams(
            dimension_semantics=("parallel", "arbitrary"),
            vmem_limit_bytes=32 * 1024 * 1024,
        ),
    )(logits, targets)

    return jnp.mean(per_row[:N, 0])


class OrdLabelMoCoHierarchyLoss:
    """Drop-in (forward-only) equivalent of the PyTorch module."""

    def __init__(self, lambd=0.5, q_tile=2048, n_tile=256):
        self.lambd = float(lambd)
        self.q_tile = int(q_tile)
        self.n_tile = int(n_tile)

    def __call__(self, logits, targets):
        return ord_label_moco_hierarchy_loss(
            logits, targets, lambd=self.lambd,
            q_tile=self.q_tile, n_tile=self.n_tile)


# ---------------------------------------------------------------------------
# Pure-JAX reference (for verification only)
# ---------------------------------------------------------------------------

def _reference_loss(logits, targets, lambd):
    x = logits.astype(jnp.float32)
    t = targets.astype(jnp.float32)
    lse = jax.nn.logsumexp(x, axis=1, keepdims=True)
    nll = lse - x
    flag1 = (t == t[:, :1]).astype(jnp.float32)
    f = (t <= 2.0)
    flag2 = (f == f[:, :1]).astype(jnp.float32)
    term1 = (nll * flag1).sum(1) / flag1.sum(1)
    term2 = (nll * flag2).sum(1) / flag2.sum(1)
    return lambd * term1.mean() + (1.0 - lambd) * term2.mean()


# ---------------------------------------------------------------------------
# Demo
# ---------------------------------------------------------------------------

if __name__ == "__main__":
    key = jax.random.PRNGKey(0)
    k1, k2 = jax.random.split(key)

    # Small shapes: batch=6 (exercises row padding), queue=384 with q_tile=128
    # (exercises the multi-block online reduction).
    N, Q = 6, 384
    logits = jax.random.normal(k1, (N, Q), jnp.float32) * 5.0
    targets = jax.random.randint(k2, (N, Q), 0, 5).astype(jnp.float32)

    lambd = 0.3
    crit = OrdLabelMoCoHierarchyLoss(lambd=lambd, q_tile=128)
    loss = crit(logits, targets)
    jax.block_until_ready(loss)

    ref = _reference_loss(logits, targets, lambd)
    if not jnp.allclose(loss, ref, rtol=1e-5, atol=1e-5):
        raise AssertionError(f"mismatch: kernel={loss} ref={ref}")

    print("KERNEL_OK")
</pallas_src>

<mosaic_0001>
module attributes {stable_mosaic.version = 11 : i64} {
  func.func @_ord_moco_hier_kernel(%arg0: i32, %arg1: i32, %arg2: memref<8x128xf32, #tpu.memory_space<vmem>>, %arg3: memref<8x128xf32, #tpu.memory_space<vmem>>, %arg4: memref<8x1xf32, #tpu.memory_space<vmem>>, %arg5: memref<8x1xf32, #tpu.memory_space<vmem>>, %arg6: memref<8x1xf32, #tpu.memory_space<vmem>>, %arg7: memref<8x1xf32, #tpu.memory_space<vmem>>, %arg8: memref<8x1xf32, #tpu.memory_space<vmem>>, %arg9: memref<8x1xf32, #tpu.memory_space<vmem>>, %arg10: memref<8x1xf32, #tpu.memory_space<vmem>>, %arg11: memref<8x1xf32, #tpu.memory_space<vmem>>) attributes {dimension_semantics = [#tpu.dimension_semantics<parallel>, #tpu.dimension_semantics<arbitrary>], iteration_bounds = array<i64: 1, 3>, scalar_prefetch = 0 : i64, scratch_operands = 7 : i64, tpu.core_type = #tpu.core_type<tc>, window_params = [{transform_indices = @transform_0, window_bounds = array<i64: 8, 128>}, {transform_indices = @transform_1, window_bounds = array<i64: 8, 128>}, {transform_indices = @transform_2, window_bounds = array<i64: 8, 1>}]} {
    %c0_i32 = arith.constant 0 : i32
    %0 = arith.cmpi eq, %arg1, %c0_i32 : i32
    %1 = arith.extui %0 : i1 to i32
    %c0_i32_0 = arith.constant 0 : i32
    %2 = arith.cmpi ne, %1, %c0_i32_0 : i32
    scf.if %2 {
      %cst_41 = arith.constant 0xFF800000 : f32
      %75 = vector.broadcast %cst_41 : f32 to vector<8x1xf32>
      %c0_42 = arith.constant 0 : index
      %c0_43 = arith.constant 0 : index
      %76 = vector.load %arg5[%c0_42, %c0_43] : memref<8x1xf32, #tpu.memory_space<vmem>>, vector<8x1xf32>
      tpu.vector_store %arg5[%c0_42, %c0_43], %75 {strides = array<i32>} : memref<8x1xf32, #tpu.memory_space<vmem>>, vector<8x1xf32>,
      %cst_44 = arith.constant 0.000000e+00 : f32
      %77 = vector.broadcast %cst_44 : f32 to vector<8x1xf32>
      %c0_45 = arith.constant 0 : index
      %c0_46 = arith.constant 0 : index
      %78 = vector.load %arg6[%c0_45, %c0_46] : memref<8x1xf32, #tpu.memory_space<vmem>>, vector<8x1xf32>
      tpu.vector_store %arg6[%c0_45, %c0_46], %77 {strides = array<i32>} : memref<8x1xf32, #tpu.memory_space<vmem>>, vector<8x1xf32>,
      %cst_47 = arith.constant 0.000000e+00 : f32
      %79 = vector.broadcast %cst_47 : f32 to vector<8x1xf32>
      %c0_48 = arith.constant 0 : index
      %c0_49 = arith.constant 0 : index
      %80 = vector.load %arg7[%c0_48, %c0_49] : memref<8x1xf32, #tpu.memory_space<vmem>>, vector<8x1xf32>
      tpu.vector_store %arg7[%c0_48, %c0_49], %79 {strides = array<i32>} : memref<8x1xf32, #tpu.memory_space<vmem>>, vector<8x1xf32>,
      %cst_50 = arith.constant 0.000000e+00 : f32
      %81 = vector.broadcast %cst_50 : f32 to vector<8x1xf32>
      %c0_51 = arith.constant 0 : index
      %c0_52 = arith.constant 0 : index
      %82 = vector.load %arg8[%c0_51, %c0_52] : memref<8x1xf32, #tpu.memory_space<vmem>>, vector<8x1xf32>
      tpu.vector_store %arg8[%c0_51, %c0_52], %81 {strides = array<i32>} : memref<8x1xf32, #tpu.memory_space<vmem>>, vector<8x1xf32>,
      %cst_53 = arith.constant 0.000000e+00 : f32
      %83 = vector.broadcast %cst_53 : f32 to vector<8x1xf32>
      %c0_54 = arith.constant 0 : index
      %c0_55 = arith.constant 0 : index
      %84 = vector.load %arg9[%c0_54, %c0_55] : memref<8x1xf32, #tpu.memory_space<vmem>>, vector<8x1xf32>
      tpu.vector_store %arg9[%c0_54, %c0_55], %83 {strides = array<i32>} : memref<8x1xf32, #tpu.memory_space<vmem>>, vector<8x1xf32>,
      %cst_56 = arith.constant 0.000000e+00 : f32
      %85 = vector.broadcast %cst_56 : f32 to vector<8x1xf32>
      %c0_57 = arith.constant 0 : index
      %c0_58 = arith.constant 0 : index
      %86 = vector.load %arg10[%c0_57, %c0_58] : memref<8x1xf32, #tpu.memory_space<vmem>>, vector<8x1xf32>
      tpu.vector_store %arg10[%c0_57, %c0_58], %85 {strides = array<i32>} : memref<8x1xf32, #tpu.memory_space<vmem>>, vector<8x1xf32>,
      %c0_59 = arith.constant 0 : index
      %c0_60 = arith.constant 0 : index
      %87 = vector.load %arg3[%c0_59, %c0_60] : memref<8x128xf32, #tpu.memory_space<vmem>>, vector<8x1xf32>
      %c0_61 = arith.constant 0 : index
      %c0_62 = arith.constant 0 : index
      %88 = vector.load %arg11[%c0_61, %c0_62] : memref<8x1xf32, #tpu.memory_space<vmem>>, vector<8x1xf32>
      tpu.vector_store %arg11[%c0_61, %c0_62], %87 {strides = array<i32>} : memref<8x1xf32, #tpu.memory_space<vmem>>, vector<8x1xf32>,
    } else {
    }
    %c0 = arith.constant 0 : index
    %c0_1 = arith.constant 0 : index
    %3 = vector.load %arg2[%c0, %c0_1] : memref<8x128xf32, #tpu.memory_space<vmem>>, vector<8x128xf32>
    %c0_2 = arith.constant 0 : index
    %c0_3 = arith.constant 0 : index
    %4 = vector.load %arg3[%c0_2, %c0_3] : memref<8x128xf32, #tpu.memory_space<vmem>>, vector<8x128xf32>
    %c128_i32 = arith.constant 128 : i32
    %5 = arith.muli %arg1, %c128_i32 : i32
    %6 = tpu.iota {dimensions = array<i32: 1>} : vector<8x128xi32>
    %7 = vector.broadcast %5 : i32 to vector<8x128xi32>
    %8 = arith.addi %7, %6 : vector<8x128xi32>
    %c384_i32 = arith.constant 384 : i32
    %9 = vector.broadcast %c384_i32 : i32 to vector<8x128xi32>
    %10 = arith.cmpi slt, %8, %9 : vector<8x128xi32>
    %cst = arith.constant 0xFF800000 : f32
    %11 = vector.broadcast %cst : f32 to vector<8x128xf32>
    %12 = arith.select %10, %3, %11 : vector<8x128xi1>, vector<8x128xf32>
    %c0_4 = arith.constant 0 : index
    %c0_5 = arith.constant 0 : index
    %13 = vector.load %arg5[%c0_4, %c0_5] : memref<8x1xf32, #tpu.memory_space<vmem>>, vector<8x1xf32>
    %cst_6 = arith.constant dense<0xFF800000> : vector<8xf32>
    %14 = vector.multi_reduction <maximumf>, %12, %cst_6 [1] : vector<8x128xf32> to vector<8xf32>
    %15 = vector.shape_cast %14 : vector<8xf32> to vector<8x1xf32>
    %16 = arith.maximumf %13, %15 : vector<8x1xf32>
    %c0_7 = arith.constant 0 : index
    %c0_8 = arith.constant 0 : index
    %17 = vector.load %arg6[%c0_7, %c0_8] : memref<8x1xf32, #tpu.memory_space<vmem>>, vector<8x1xf32>
    %18 = arith.subf %13, %16 : vector<8x1xf32>
    %19 = math.exp %18 : vector<8x1xf32>
    %20 = arith.mulf %17, %19 : vector<8x1xf32>
    %21 = vector.broadcast %16 : vector<8x1xf32> to vector<8x128xf32>
    %22 = arith.subf %12, %21 : vector<8x128xf32>
    %23 = math.exp %22 : vector<8x128xf32>
    %cst_9 = arith.constant dense<0.000000e+00> : vector<8xf32>
    %24 = vector.multi_reduction <add>, %23, %cst_9 [1] : vector<8x128xf32> to vector<8xf32>
    %25 = vector.shape_cast %24 : vector<8xf32> to vector<8x1xf32>
    %26 = arith.addf %20, %25 : vector<8x1xf32>
    %c0_10 = arith.constant 0 : index
    %c0_11 = arith.constant 0 : index
    %27 = vector.load %arg6[%c0_10, %c0_11] : memref<8x1xf32, #tpu.memory_space<vmem>>, vector<8x1xf32>
    tpu.vector_store %arg6[%c0_10, %c0_11], %26 {strides = array<i32>} : memref<8x1xf32, #tpu.memory_space<vmem>>, vector<8x1xf32>,
    %c0_12 = arith.constant 0 : index
    %c0_13 = arith.constant 0 : index
    %28 = vector.load %arg5[%c0_12, %c0_13] : memref<8x1xf32, #tpu.memory_space<vmem>>, vector<8x1xf32>
    tpu.vector_store %arg5[%c0_12, %c0_13], %16 {strides = array<i32>} : memref<8x1xf32, #tpu.memory_space<vmem>>, vector<8x1xf32>,
    %c0_14 = arith.constant 0 : index
    %c0_15 = arith.constant 0 : index
    %29 = vector.load %arg11[%c0_14, %c0_15] : memref<8x1xf32, #tpu.memory_space<vmem>>, vector<8x1xf32>
    %30 = vector.broadcast %29 : vector<8x1xf32> to vector<8x128xf32>
    %31 = arith.cmpf oeq, %4, %30 : vector<8x128xf32>
    %32 = arith.andi %31, %10 : vector<8x128xi1>
    %cst_16 = arith.constant 2.000000e+00 : f32
    %33 = vector.broadcast %cst_16 : f32 to vector<8x128xf32>
    %34 = arith.cmpf ole, %4, %33 : vector<8x128xf32>
    %35 = arith.extui %34 : vector<8x128xi1> to vector<8x128xi32>
    %36 = arith.sitofp %35 : vector<8x128xi32> to vector<8x128xf32>
    %cst_17 = arith.constant 2.000000e+00 : f32
    %37 = vector.broadcast %cst_17 : f32 to vector<8x1xf32>
    %38 = arith.cmpf ole, %29, %37 : vector<8x1xf32>
    %39 = arith.extui %38 : vector<8x1xi1> to vector<8x1xi32>
    %40 = arith.sitofp %39 : vector<8x1xi32> to vector<8x1xf32>
    %41 = vector.broadcast %40 : vector<8x1xf32> to vector<8x128xf32>
    %42 = arith.cmpf oeq, %36, %41 : vector<8x128xf32>
    %43 = arith.andi %42, %10 : vector<8x128xi1>
    %c0_18 = arith.constant 0 : index
    %c0_19 = arith.constant 0 : index
    %44 = vector.load %arg7[%c0_18, %c0_19] : memref<8x1xf32, #tpu.memory_space<vmem>>, vector<8x1xf32>
    %cst_20 = arith.constant 0.000000e+00 : f32
    %45 = vector.broadcast %cst_20 : f32 to vector<8x128xf32>
    %46 = arith.select %32, %3, %45 : vector<8x128xi1>, vector<8x128xf32>
    %cst_21 = arith.constant dense<0.000000e+00> : vector<8xf32>
    %47 = vector.multi_reduction <add>, %46, %cst_21 [1] : vector<8x128xf32> to vector<8xf32>
    %48 = vector.shape_cast %47 : vector<8xf32> to vector<8x1xf32>
    %49 = arith.addf %44, %48 : vector<8x1xf32>
    %c0_22 = arith.constant 0 : index
    %c0_23 = arith.constant 0 : index
    %50 = vector.load %arg7[%c0_22, %c0_23] : memref<8x1xf32, #tpu.memory_space<vmem>>, vector<8x1xf32>
    tpu.vector_store %arg7[%c0_22, %c0_23], %49 {strides = array<i32>} : memref<8x1xf32, #tpu.memory_space<vmem>>, vector<8x1xf32>,
    %c0_24 = arith.constant 0 : index
    %c0_25 = arith.constant 0 : index
    %51 = vector.load %arg8[%c0_24, %c0_25] : memref<8x1xf32, #tpu.memory_space<vmem>>, vector<8x1xf32>
    %52 = arith.extui %32 : vector<8x128xi1> to vector<8x128xi32>
    %53 = arith.sitofp %52 : vector<8x128xi32> to vector<8x128xf32>
    %cst_26 = arith.constant dense<0.000000e+00> : vector<8xf32>
    %54 = vector.multi_reduction <add>, %53, %cst_26 [1] : vector<8x128xf32> to vector<8xf32>
    %55 = vector.shape_cast %54 : vector<8xf32> to vector<8x1xf32>
    %56 = arith.addf %51, %55 : vector<8x1xf32>
    %c0_27 = arith.constant 0 : index
    %c0_28 = arith.constant 0 : index
    %57 = vector.load %arg8[%c0_27, %c0_28] : memref<8x1xf32, #tpu.memory_space<vmem>>, vector<8x1xf32>
    tpu.vector_store %arg8[%c0_27, %c0_28], %56 {strides = array<i32>} : memref<8x1xf32, #tpu.memory_space<vmem>>, vector<8x1xf32>,
    %c0_29 = arith.constant 0 : index
    %c0_30 = arith.constant 0 : index
    %58 = vector.load %arg9[%c0_29, %c0_30] : memref<8x1xf32, #tpu.memory_space<vmem>>, vector<8x1xf32>
    %cst_31 = arith.constant 0.000000e+00 : f32
    %59 = vector.broadcast %cst_31 : f32 to vector<8x128xf32>
    %60 = arith.select %43, %3, %59 : vector<8x128xi1>, vector<8x128xf32>
    %cst_32 = arith.constant dense<0.000000e+00> : vector<8xf32>
    %61 = vector.multi_reduction <add>, %60, %cst_32 [1] : vector<8x128xf32> to vector<8xf32>
    %62 = vector.shape_cast %61 : vector<8xf32> to vector<8x1xf32>
    %63 = arith.addf %58, %62 : vector<8x1xf32>
    %c0_33 = arith.constant 0 : index
    %c0_34 = arith.constant 0 : index
    %64 = vector.load %arg9[%c0_33, %c0_34] : memref<8x1xf32, #tpu.memory_space<vmem>>, vector<8x1xf32>
    tpu.vector_store %arg9[%c0_33, %c0_34], %63 {strides = array<i32>} : memref<8x1xf32, #tpu.memory_space<vmem>>, vector<8x1xf32>,
    %c0_35 = arith.constant 0 : index
    %c0_36 = arith.constant 0 : index
    %65 = vector.load %arg10[%c0_35, %c0_36] : memref<8x1xf32, #tpu.memory_space<vmem>>, vector<8x1xf32>
    %66 = arith.extui %43 : vector<8x128xi1> to vector<8x128xi32>
    %67 = arith.sitofp %66 : vector<8x128xi32> to vector<8x128xf32>
    %cst_37 = arith.constant dense<0.000000e+00> : vector<8xf32>
    %68 = vector.multi_reduction <add>, %67, %cst_37 [1] : vector<8x128xf32> to vector<8xf32>
    %69 = vector.shape_cast %68 : vector<8xf32> to vector<8x1xf32>
    %70 = arith.addf %65, %69 : vector<8x1xf32>
    %c0_38 = arith.constant 0 : index
    %c0_39 = arith.constant 0 : index
    %71 = vector.load %arg10[%c0_38, %c0_39] : memref<8x1xf32, #tpu.memory_space<vmem>>, vector<8x1xf32>
    tpu.vector_store %arg10[%c0_38, %c0_39], %70 {strides = array<i32>} : memref<8x1xf32, #tpu.memory_space<vmem>>, vector<8x1xf32>,
    %c2_i32 = arith.constant 2 : i32
    %72 = arith.cmpi eq, %arg1, %c2_i32 : i32
    %73 = arith.extui %72 : i1 to i32
    %c0_i32_40 = arith.constant 0 : i32
    %74 = arith.cmpi ne, %73, %c0_i32_40 : i32
    scf.if %74 {
      %c0_41 = arith.constant 0 : index
      %c0_42 = arith.constant 0 : index
      %75 = vector.load %arg5[%c0_41, %c0_42] : memref<8x1xf32, #tpu.memory_space<vmem>>, vector<8x1xf32>
      %c0_43 = arith.constant 0 : index
      %c0_44 = arith.constant 0 : index
      %76 = vector.load %arg6[%c0_43, %c0_44] : memref<8x1xf32, #tpu.memory_space<vmem>>, vector<8x1xf32>
      %77 = math.log %76 : vector<8x1xf32>
      %78 = arith.addf %75, %77 : vector<8x1xf32>
      %c0_45 = arith.constant 0 : index
      %c0_46 = arith.constant 0 : index
      %79 = vector.load %arg7[%c0_45, %c0_46] : memref<8x1xf32, #tpu.memory_space<vmem>>, vector<8x1xf32>
      %c0_47 = arith.constant 0 : index
      %c0_48 = arith.constant 0 : index
      %80 = vector.load %arg8[%c0_47, %c0_48] : memref<8x1xf32, #tpu.memory_space<vmem>>, vector<8x1xf32>
      %81 = arith.divf %79, %80 : vector<8x1xf32>
      %82 = arith.subf %78, %81 : vector<8x1xf32>
      %c0_49 = arith.constant 0 : index
      %c0_50 = arith.constant 0 : index
      %83 = vector.load %arg9[%c0_49, %c0_50] : memref<8x1xf32, #tpu.memory_space<vmem>>, vector<8x1xf32>
      %c0_51 = arith.constant 0 : index
      %c0_52 = arith.constant 0 : index
      %84 = vector.load %arg10[%c0_51, %c0_52] : memref<8x1xf32, #tpu.memory_space<vmem>>, vector<8x1xf32>
      %85 = arith.divf %83, %84 : vector<8x1xf32>
      %86 = arith.subf %78, %85 : vector<8x1xf32>
      %cst_53 = arith.constant 3.000000e-01 : f32
      %87 = vector.broadcast %cst_53 : f32 to vector<8x1xf32>
      %88 = arith.mulf %87, %82 : vector<8x1xf32>
      %cst_54 = arith.constant 0.699999988 : f32
      %89 = vector.broadcast %cst_54 : f32 to vector<8x1xf32>
      %90 = arith.mulf %89, %86 : vector<8x1xf32>
      %91 = arith.addf %88, %90 : vector<8x1xf32>
      %c0_55 = arith.constant 0 : index
      %c0_56 = arith.constant 0 : index
      %92 = vector.load %arg4[%c0_55, %c0_56] : memref<8x1xf32, #tpu.memory_space<vmem>>, vector<8x1xf32>
      tpu.vector_store %arg4[%c0_55, %c0_56], %91 {strides = array<i32>} : memref<8x1xf32, #tpu.memory_space<vmem>>, vector<8x1xf32>,
    } else {
    }
    return
  }
  func.func @transform_0(%arg0: i32, %arg1: i32) -> (i32, i32) {
    %c0_i32 = arith.constant 0 : i32
    return %arg0, %arg1 : i32, i32
  }
  func.func @transform_1(%arg0: i32, %arg1: i32) -> (i32, i32) {
    %c0_i32 = arith.constant 0 : i32
    return %arg0, %arg1 : i32, i32
  }
  func.func @transform_2(%arg0: i32, %arg1: i32) -> (i32, i32) {
    %c0_i32 = arith.constant 0 : i32
    %c0_i32_0 = arith.constant 0 : i32
    return %arg0, %c0_i32 : i32, i32
  }
}

</mosaic_0001>

<llo_original>
// kernel: ord_label_moco_hierarchy_loss.1
$region0: #{ord_label_moco_hierarchy_loss.1}
  #allocation0 [shape = 'u32[]', space=smem, size = 0x4, offset = 0x4, fixed_abs, tag = 'smem constant byte address 0x4 - core index']
  #allocation1 [shape = 'u32[144,128]{1,0:T(1,128)}', space=vmem, size = 0x12000, scoped, tag = 'internal scratch']
  #allocation2 [shape = 'f32[8,1]{1,0:T(8,128)}', space=vmem, size = 0x1000, scoped, tag = 'scratch operand']
  #allocation3 [shape = 'f32[8,1]{1,0:T(8,128)}', space=vmem, size = 0x1000, scoped, tag = 'scratch operand']
  #allocation4 [shape = 'f32[8,1]{1,0:T(8,128)}', space=vmem, size = 0x1000, scoped, tag = 'scratch operand']
  #allocation5 [shape = 'f32[8,1]{1,0:T(8,128)}', space=vmem, size = 0x1000, scoped, tag = 'scratch operand']
  #allocation6 [shape = 'f32[8,1]{1,0:T(8,128)}', space=vmem, size = 0x1000, scoped, tag = 'scratch operand']
  #allocation7 [shape = 'f32[8,1]{1,0:T(8,128)}', space=vmem, size = 0x1000, scoped, tag = 'scratch operand']
  #allocation8 [shape = 'f32[8,1]{1,0:T(8,128)}', space=vmem, size = 0x1000, scoped, tag = 'scratch operand']
  %s0 = inlined_call_operand.vmem [shape: f32[8,384], index: 0, kind: input, shape index: {}]
  %s1 = inlined_call_operand.vmem [shape: f32[8,384], index: 1, kind: input, shape index: {}]
  %s2 = inlined_call_operand.vmem [shape: f32[8,1], index: 2, kind: output, shape index: {}]
  %s3 = sld [smem:[#allocation0]]
  $region49: #{ord_label_moco_hierarchy_loss.1} parent=0
    _
  %s5 = ssub.s32 1, %s3
  %s6 = scalar_select 0, %s5, %s3
  loop: start=0, step=1, limit=5
  $region2: #{ord_label_moco_hierarchy_loss.1} parent=0 // loop_pre_header
    _
  $region3: #{ord_label_moco_hierarchy_loss.1} parent=0 // loop_header
    %s8 = sphi 0, %s12
    %p9 = scmp.ge.s32.totalorder %s8, 5
    %s15 = sphi 0, %s27
    %s16 = sphi 0, %s23
    %s17 = sphi 0, %s15
    %s18 = sphi 0, %s16
    %s19 = sphi 0, %s17
    %s20 = sphi 0, %s18
    %s32 = sphi 0, %s34
    %s35 = sphi 0, %s32
    %s36 = sphi 0, %s35
    %s52 = sphi 0, %s36
    %s60 = sphi 0, %s62
    %s63 = sphi 0, %s60
    %s64 = sphi 0, %s63
    %s80 = sphi 0, %s64
    %s86 = sphi 0, %s88
    %s89 = sphi 0, %s86
    %s90 = sphi 0, %s89
    %s106 = sphi 0, %s90
  $region4: #{ord_label_moco_hierarchy_loss.1} parent=0 // loop_header_branch
    %11 = sbr.rel (%p9) target = $region8
  $region5: #{ord_label_moco_hierarchy_loss.1} parent=0 // loop_body
    %s13 = ssub.s32 %s8, 1
    %s14 = ssub.s32 %s8, 2
    %s21 = sadd.s32 1, %s16
    %p22 = scmp.ge.s32.totalorder %s21, 3
    %s23 = scalar_select %p22, 0, %s21
    %s24 = sadd.s32 1, %s15
    %s25 = scalar_select %p22, %s24, %s15
    %p26 = scmp.ge.s32.totalorder %s25, 1
    %s27 = scalar_select %p26, 0, %s25
    %s28 = ssub.s32 %s15, %s27
    %s29 = ssub.s32 %s16, %s23
    %s30 = sor.u32 %s28, %s29
    %p31 = scmp.eq.s32.totalorder %s30, 0
    %s33 = sadd.s32 %s32, 1
    %s34 = scalar_select %p31, %s32, %s33
    %p37 = pneg %p31
    %p38 = scmp.eq.s32.totalorder %s8, 2
    %p39 = por %p37, %p38
    %p40 = scmp.ne.s32.totalorder %s32, %s35
    %p41 = scmp.eq.s32.totalorder %s8, 0
    %p42 = por %p40, %p41
    %p43 = scmp.ne.s32.totalorder %s32, %s35
    %p44 = scmp.eq.s32.totalorder %s13, 2
    %p45 = por %p43, %p44
    %p46 = scmp.ne.s32.totalorder %s35, %s36
    %p47 = scmp.eq.s32.totalorder %s13, 0
    %p48 = por %p46, %p47
    %p49 = scmp.ne.s32.totalorder %s35, %s36
    %p50 = scmp.eq.s32.totalorder %s14, 2
    %p51 = por %p49, %p50
    %p53 = scmp.ne.s32.totalorder %s36, %s52
    %p54 = scmp.eq.s32.totalorder %s14, 0
    %p55 = por %p53, %p54
    %s56 = ssub.s32 %s15, %s27
    %s57 = ssub.s32 %s16, %s23
    %s58 = sor.u32 %s56, %s57
    %p59 = scmp.eq.s32.totalorder %s58, 0
    %s61 = sadd.s32 %s60, 1
    %s62 = scalar_select %p59, %s60, %s61
    %p65 = pneg %p59
    %p66 = scmp.eq.s32.totalorder %s8, 2
    %p67 = por %p65, %p66
    %p68 = scmp.ne.s32.totalorder %s60, %s63
    %p69 = scmp.eq.s32.totalorder %s8, 0
    %p70 = por %p68, %p69
    %p71 = scmp.ne.s32.totalorder %s60, %s63
    %p72 = scmp.eq.s32.totalorder %s13, 2
    %p73 = por %p71, %p72
    %p74 = scmp.ne.s32.totalorder %s63, %s64
    %p75 = scmp.eq.s32.totalorder %s13, 0
    %p76 = por %p74, %p75
    %p77 = scmp.ne.s32.totalorder %s63, %s64
    %p78 = scmp.eq.s32.totalorder %s14, 2
    %p79 = por %p77, %p78
    %p81 = scmp.ne.s32.totalorder %s64, %s80
    %p82 = scmp.eq.s32.totalorder %s14, 0
    %p83 = por %p81, %p82
    %s84 = ssub.s32 %s15, %s27
    %p85 = scmp.eq.s32.totalorder %s84, 0
    %s87 = sadd.s32 %s86, 1
    %s88 = scalar_select %p85, %s86, %s87
    %p91 = pneg %p85
    %p92 = scmp.eq.s32.totalorder %s8, 2
    %p93 = por %p91, %p92
    %p94 = scmp.ne.s32.totalorder %s86, %s89
    %p95 = scmp.eq.s32.totalorder %s8, 0
    %p96 = por %p94, %p95
    %p97 = scmp.ne.s32.totalorder %s86, %s89
    %p98 = scmp.eq.s32.totalorder %s13, 2
    %p99 = por %p97, %p98
    %p100 = scmp.ne.s32.totalorder %s89, %s90
    %p101 = scmp.eq.s32.totalorder %s13, 0
    %p102 = por %p100, %p101
    %p103 = scmp.ne.s32.totalorder %s89, %s90
    %p104 = scmp.eq.s32.totalorder %s14, 2
    %p105 = por %p103, %p104
    %p107 = scmp.ne.s32.totalorder %s90, %s106
    %p108 = scmp.eq.s32.totalorder %s14, 0
    %p109 = por %p107, %p108
    %p110 = scmp.le.s32.totalorder 1, %s8
    %p111 = scmp.lt.s32.totalorder %s8, 4
    %p112 = pnand %p110, %p111
    %p113 = pneg %p112
    // Predicated region
    $region9: #{ord_label_moco_hierarchy_loss.1} parent=5 // pred_check
      _
    $region10: #{ord_label_moco_hierarchy_loss.1} parent=5 // pred_check_branch
      %115 = sbr.rel (%p112) target = $region12
    $region11: #{ord_label_moco_hierarchy_loss.1} parent=5 // pred_region
      %s116 = ssub.s32 %s8, 1
    $region12: #{ord_label_moco_hierarchy_loss.1} parent=5 // pred_fallthru
      _
    %p117 = scmp.lt.s32.totalorder %s8, 3
    // Predicated region
    $region13: #{ord_label_moco_hierarchy_loss.1} parent=5 // pred_check
      %p118 = pneg %p117
    $region14: #{ord_label_moco_hierarchy_loss.1} parent=5 // pred_check_branch
      %120 = sbr.rel (%p118) target = $region16
    $region15: #{ord_label_moco_hierarchy_loss.1} parent=5 // pred_region
      // Predicated region
      $region17: #{ord_label_moco_hierarchy_loss.1} parent=15 // pred_check
        %p121 = pneg %p42
      $region18: #{ord_label_moco_hierarchy_loss.1} parent=15 // pred_check_branch
        %123 = sbr.rel (%p121) target = $region20
      $region19: #{ord_label_moco_hierarchy_loss.1} parent=15 // pred_region
        %p124 = scmp.lt.s32.totalorder %s15, 0
        %s125 = scalar_select %p124, %s15, 0
        %p126 = scmp.lt.s32.totalorder %s16, 2
        %s127 = scalar_select %p126, %s16, 2
        %s128 = smul.addr %s125, 3
        %s129 = sadd.s32 %s127, %s128
        %s130 = smul.addr %s129, 8
        %s131 = scalar_lea.vmem %s0, %s130
      $region20: #{ord_label_moco_hierarchy_loss.1} parent=15 // pred_fallthru
        _
      // Predicated region
      $region21: #{ord_label_moco_hierarchy_loss.1} parent=15 // pred_check
        %p132 = pneg %p70
      $region22: #{ord_label_moco_hierarchy_loss.1} parent=15 // pred_check_branch
        %134 = sbr.rel (%p132) target = $region24
      $region23: #{ord_label_moco_hierarchy_loss.1} parent=15 // pred_region
        %p135 = scmp.lt.s32.totalorder %s15, 0
        %s136 = scalar_select %p135, %s15, 0
        %p137 = scmp.lt.s32.totalorder %s16, 2
        %s138 = scalar_select %p137, %s16, 2
        %s139 = smul.addr %s136, 3
        %s140 = sadd.s32 %s138, %s139
        %s141 = smul.addr %s140, 8
        %s142 = scalar_lea.vmem %s1, %s141
      $region24: #{ord_label_moco_hierarchy_loss.1} parent=15 // pred_fallthru
        _
    $region16: #{ord_label_moco_hierarchy_loss.1} parent=5 // pred_fallthru
      _
    %p143 = scmp.le.s32.totalorder 1, %s8
    %p144 = scmp.lt.s32.totalorder %s8, 4
    %p145 = pnand %p143, %p144
    %p146 = pneg %p145
    // Predicated region
    $region25: #{ord_label_moco_hierarchy_loss.1} parent=5 // pred_check
      _
    $region26: #{ord_label_moco_hierarchy_loss.1} parent=5 // pred_check_branch
      %148 = sbr.rel (%p145) target = $region28
    $region27: #{ord_label_moco_hierarchy_loss.1} parent=5 // pred_region
      %s149 = ssub.s32 %s8, 1
      %p150 = scmp.lt.s32.totalorder %s17, 0
      %s151 = scalar_select %p150, %s17, 0
      %p152 = scmp.lt.s32.totalorder %s18, 2
      %s153 = scalar_select %p152, %s18, 2
      %s154 = smul.addr %s151, 3
      %s155 = sadd.s32 %s153, %s154
      %s156 = smul.addr %s155, 8
      %s157 = scalar_lea.vmem %s0, %s156
      %p158 = pneg %p48
      %p159 = pneg %p45
      %p160 = scmp.lt.s32.totalorder %s17, 0
      %s161 = scalar_select %p160, %s17, 0
      %p162 = scmp.lt.s32.totalorder %s18, 2
      %s163 = scalar_select %p162, %s18, 2
      %s164 = smul.addr %s161, 3
      %s165 = sadd.s32 %s163, %s164
      %s166 = smul.addr %s165, 8
      %s167 = scalar_lea.vmem %s1, %s166
      %p168 = pneg %p76
      %p169 = pneg %p73
      %p170 = pneg %p102
      %p171 = pneg %p99
      %p172 = scmp.lt.s32.totalorder %s17, 0
      %s173 = scalar_select %p172, %s17, 0
      %s174 = smul.addr %s173, 8
      %s175 = scalar_lea.vmem %s2, %s174
      %p176 = scmp.lt.s32.totalorder %s17, 0
      %s177 = scalar_select %p176, %s17, 0
      %p178 = scmp.lt.s32.totalorder %s18, 2
      %s179 = scalar_select %p178, %s18, 2
      %s180 = smul.addr %s177, 3
      %s181 = sadd.s32 %s179, %s180
      %s182 = smul.addr %s181, 8
      %s183 = scalar_lea.vmem %s0, %s182
      %p184 = scmp.lt.s32.totalorder %s17, 0
      %s185 = scalar_select %p184, %s17, 0
      %p186 = scmp.lt.s32.totalorder %s18, 2
      %s187 = scalar_select %p186, %s18, 2
      %s188 = smul.addr %s185, 3
      %s189 = sadd.s32 %s187, %s188
      %s190 = smul.addr %s189, 8
      %s191 = scalar_lea.vmem %s1, %s190
      %p192 = scmp.lt.s32.totalorder %s17, 0
      %s193 = scalar_select %p192, %s17, 0
      %s194 = smul.addr %s193, 8
      %s195 = scalar_lea.vmem %s2, %s194
      %p196 = scmp.eq.s32.totalorder %s18, 0
      // Predicated region
      $region29: #{ord_label_moco_hierarchy_loss.1} parent=27 // pred_check
        %p197 = pneg %p196
      $region30: #{ord_label_moco_hierarchy_loss.1} parent=27 // pred_check_branch
        %199 = sbr.rel (%p197) target = $region32
      $region31: #{ord_label_moco_hierarchy_loss.1} parent=27 // pred_region
        %vm200 = vcmask 7168
        %201 = vst.msk [vmem:[#allocation2] sm:$0xff] %vm200, -inf
        %202 = vst.msk [vmem:[#allocation3] sm:$0xff] %vm200, 0.0
        %203 = vst.msk [vmem:[#allocation4] sm:$0xff] %vm200, 0.0
        %204 = vst.msk [vmem:[#allocation5] sm:$0xff] %vm200, 0.0
        %205 = vst.msk [vmem:[#allocation6] sm:$0xff] %vm200, 0.0
        %206 = vst.msk [vmem:[#allocation7] sm:$0xff] %vm200, 0.0
        %v207 = vld [vmem:[%s191] sm:$0xff]
        %208 = vst.msk [vmem:[#allocation8] sm:$0xff] %vm200, %v207
      $region32: #{ord_label_moco_hierarchy_loss.1} parent=27 // pred_fallthru
        _
      %v209 = vld [vmem:[%s183] sm:$0xff]
      %v210 = vld [vmem:[%s191] sm:$0xff]
      %s211 = smul.u32 %s18, 128
      %v212 = vlaneseq
      %v213 = vand.u32 %v212, 127
      %v214 = vstv %s211
      %v215 = vadd.s32 %v214, %v213
      %vm216 = vcmp.lt.s32.totalorder %v215, 384
      %v217 = vsel %vm216, %v209, -inf
      %v218 = vld [vmem:[#allocation2] sm:$0xff]
      %219 = vmax.xlane.f32.xlu0 %v217
      %v220 = vpop.xlane.xlu0 %219
      %v221 = vmax.f32 %v218, %v220
      %v222 = vld [vmem:[#allocation3] sm:$0xff]
      %v223 = vsub.f32 %v218, %v221
      %v224 = vmul.f32 %v223, 1.442695
      %v225 = vpow.pop %v224
      %v226 = vmul.f32 %v222, %v225
      %228 = vset.pattern.permute.xlu0 0
      %229 = vperm.xlu0 %228, %v221
      %v230 = vpop.permute.xlu0 %229
      %v232 = vsub.f32 %v217, %v230
      %v233 = vmul.f32 %v232, 1.442695
      %v234 = vpow.pop %v233
      %235 = vadd.xlane.f32.xlu0 %v234
      %v236 = vpop.xlane.xlu0 %235
      %v237 = vadd.f32 %v226, %v236
      %vm238 = vcmask 7168
      %239 = vst.msk [vmem:[#allocation3] sm:$0xff] %vm238, %v237
      %240 = vst.msk [vmem:[#allocation2] sm:$0xff] %vm238, %v221
      %v241 = vld [vmem:[#allocation8] sm:$0xff]
      %243 = vset.pattern.permute.xlu0 0
      %244 = vperm.xlu0 %243, %v241
      %v245 = vpop.permute.xlu0 %244
      %vm247 = vcmp.eq.f32.partialorder %v210, %v245
      %vm248 = vmand %vm247, %vm216
      %vm249 = vcmp.le.f32.partialorder %v210, 2.0
      %v250 = vsel %vm249, 1, 0
      %v251 = vcvt.s32.f32 %v250
      %vm252 = vcmp.le.f32.partialorder %v241, 2.0
      %v253 = vsel %vm252, 1, 0
      %v254 = vcvt.s32.f32 %v253
      %256 = vset.pattern.permute.xlu0 0
      %257 = vperm.xlu0 %256, %v254
      %v258 = vpop.permute.xlu0 %257
      %vm260 = vcmp.eq.f32.partialorder %v251, %v258
      %vm261 = vmand %vm260, %vm216
      %v262 = vld [vmem:[#allocation4] sm:$0xff]
      %v263 = vsel %vm248, %v209, 0.0
      %264 = vadd.xlane.f32.xlu0 %v263
      %v265 = vpop.xlane.xlu0 %264
      %v266 = vadd.f32 %v262, %v265
      %267 = vst.msk [vmem:[#allocation4] sm:$0xff] %vm238, %v266
      %v268 = vld [vmem:[#allocation5] sm:$0xff]
      %v269 = vsel %vm248, 1, 0
      %v270 = vcvt.s32.f32 %v269
      %271 = vadd.xlane.f32.xlu0 %v270
      %v272 = vpop.xlane.xlu0 %271
      %v273 = vadd.f32 %v268, %v272
      %274 = vst.msk [vmem:[#allocation5] sm:$0xff] %vm238, %v273
      %v275 = vld [vmem:[#allocation6] sm:$0xff]
      %v276 = vsel %vm261, %v209, 0.0
      %277 = vadd.xlane.f32.xlu0 %v276
      %v278 = vpop.xlane.xlu0 %277
      %v279 = vadd.f32 %v275, %v278
      %280 = vst.msk [vmem:[#allocation6] sm:$0xff] %vm238, %v279
      %v281 = vld [vmem:[#allocation7] sm:$0xff]
      %v282 = vsel %vm261, 1, 0
      %v283 = vcvt.s32.f32 %v282
      %284 = vadd.xlane.f32.xlu0 %v283
      %v285 = vpop.xlane.xlu0 %284
      %v286 = vadd.f32 %v281, %v285
      %287 = vst.msk [vmem:[#allocation7] sm:$0xff] %vm238, %v286
      %p288 = scmp.eq.s32.totalorder %s18, 2
      // Predicated region
      $region33: #{ord_label_moco_hierarchy_loss.1} parent=27 // pred_check
        %p289 = pneg %p288
      $region34: #{ord_label_moco_hierarchy_loss.1} parent=27 // pred_check_branch
        %291 = sbr.rel (%p289) target = $region36
      $region35: #{ord_label_moco_hierarchy_loss.1} parent=27 // pred_region
        %v292 = vld [vmem:[#allocation2] sm:$0xff]
        %v293 = vld [vmem:[#allocation3] sm:$0xff]
        %v294 = vlog2.pop %v293
        %v295 = vmul.f32 %v294, 0.6931472
        %v296 = vadd.f32 %v292, %v295
        %v297 = vld [vmem:[#allocation4] sm:$0xff]
        %v298 = vld [vmem:[#allocation5] sm:$0xff]
        %v299 = vrcp.pop %v298
        %v300 = vmul.f32 %v297, %v299
        %v301 = vsub.f32 %v296, %v300
        %v302 = vld [vmem:[#allocation6] sm:$0xff]
        %v303 = vld [vmem:[#allocation7] sm:$0xff]
        %v304 = vrcp.pop %v303
        %v305 = vmul.f32 %v302, %v304
        %v306 = vsub.f32 %v296, %v305
        %v307 = vmul.f32 %v301, 0.3
        %v308 = vmul.f32 %v306, 0.7
        %v309 = vadd.f32 %v307, %v308
        %310 = vst.msk [vmem:[%s195] sm:$0xff] %vm238, %v309
      $region36: #{ord_label_moco_hierarchy_loss.1} parent=27 // pred_fallthru
        _
      %p311 = scmp.lt.s32.totalorder %s17, 0
      %s312 = scalar_select %p311, %s17, 0
      %s313 = smul.addr %s312, 8
      %s314 = scalar_lea.vmem %s2, %s313
      // Predicated region
      $region37: #{ord_label_moco_hierarchy_loss.1} parent=27 // pred_check
        %p315 = pneg %p99
      $region38: #{ord_label_moco_hierarchy_loss.1} parent=27 // pred_check_branch
        %317 = sbr.rel (%p315) target = $region40
      $region39: #{ord_label_moco_hierarchy_loss.1} parent=27 // pred_region
        _
      $region40: #{ord_label_moco_hierarchy_loss.1} parent=27 // pred_fallthru
        _
      // Predicated region
      $region41: #{ord_label_moco_hierarchy_loss.1} parent=27 // pred_check
        %p318 = pneg %p99
      $region42: #{ord_label_moco_hierarchy_loss.1} parent=27 // pred_check_branch
        %320 = sbr.rel (%p318) target = $region44
      $region43: #{ord_label_moco_hierarchy_loss.1} parent=27 // pred_region
        %p321 = scmp.lt.s32.totalorder %s17, 0
        %s322 = scalar_select %p321, %s17, 0
        %s323 = smul.addr %s322, 8
        %s324 = scalar_lea.vmem %s2, %s323
      $region44: #{ord_label_moco_hierarchy_loss.1} parent=27 // pred_fallthru
        _
    $region28: #{ord_label_moco_hierarchy_loss.1} parent=5 // pred_fallthru
      _
    %p325 = scmp.le.s32.totalorder 2, %s8
    // Predicated region
    $region45: #{ord_label_moco_hierarchy_loss.1} parent=5 // pred_check
      %p326 = pneg %p325
    $region46: #{ord_label_moco_hierarchy_loss.1} parent=5 // pred_check_branch
      %328 = sbr.rel (%p326) target = $region48
    $region47: #{ord_label_moco_hierarchy_loss.1} parent=5 // pred_region
      %s329 = ssub.s32 %s8, 2
    $region48: #{ord_label_moco_hierarchy_loss.1} parent=5 // pred_fallthru
      _
  $region6: #{ord_label_moco_hierarchy_loss.1} parent=0 // loop_footer
    %s12 = sadd.s32 1, %s8
  $region7: #{ord_label_moco_hierarchy_loss.1} parent=0 // loop_footer_branch
    %7 = sbr.rel target = $region3
  $region8: #{ord_label_moco_hierarchy_loss.1} parent=0 // loop_exit
    _

</llo_original>
